<compile_context>
chip_gen: v6e
topology: v6e:2x2x1
jax: 0.10.0
libtpu: 0.0.40
codegen_flags: <defaults>
</compile_context>

<pallas_src>
import functools

import jax
import jax.numpy as jnp
from jax.experimental import pallas as pl
from jax.experimental.pallas import tpu as pltpu


def _pair(v):
    return tuple(v) if isinstance(v, (tuple, list)) else (v, v)


def _quadruple(v):
    return tuple(v) if isinstance(v, (tuple, list)) else (v, v, v, v)


def _r8(v):
    return -(-int(v) // 8) * 8


def _r128(v):
    return -(-int(v) // 128) * 128


# ----------------------- median selection helpers (VPU only) ----------------

def _sort2(a, b):
    return jnp.minimum(a, b), jnp.maximum(a, b)


def _sort3(a, b, c):
    a, b = _sort2(a, b)
    b, c = _sort2(b, c)
    a, b = _sort2(a, b)
    return a, b, c


def _min3(a, b, c):
    return jnp.minimum(jnp.minimum(a, b), c)


def _max3(a, b, c):
    return jnp.maximum(jnp.maximum(a, b), c)


def _median3(a, b, c):
    lo, hi = _sort2(a, b)
    return jnp.maximum(lo, jnp.minimum(hi, c))


def _take(a, axis, start, size):
    """Static slice of a 3-D Ref or array along one axis."""
    idx = [slice(None)] * 3
    idx[axis] = slice(start, start + size)
    return a[tuple(idx)]


# ------------------------------- Pallas kernel -------------------------------

def _median_kernel(x_ref, o_ref, *, kh, kw, h_out, w_out, h_axis, w_axis):
    """Median over kh x kw windows of one 3-D VMEM block.

    Window offsets slice `h_axis` / `w_axis`; the remaining axis is a
    pass-through batch/lane axis.  All work is elementwise min/max on the VPU;
    no MXU, no materialized unfold tensor, no HBM re-reads.
    """
    if kh == 3 and kw == 3:
        # Shared column sort: sort the 3 vertical taps ONCE over the full
        # width, then combine the 3 horizontal shifts with the classic
        # median-of-9 selection (max-of-mins, median-of-medians, min-of-maxes).
        r0 = _take(x_ref, h_axis, 0, h_out)
        r1 = _take(x_ref, h_axis, 1, h_out)
        r2 = _take(x_ref, h_axis, 2, h_out)
        c_lo, c_md, c_hi = _sort3(r0, r1, r2)
        lo = _max3(*(_take(c_lo, w_axis, j, w_out) for j in range(3)))
        md = _median3(*(_take(c_md, w_axis, j, w_out) for j in range(3)))
        hi = _min3(*(_take(c_hi, w_axis, j, w_out) for j in range(3)))
        o_ref[...] = _median3(lo, md, hi)
        return

    # General kernel size: statically unrolled odd-even transposition sort of
    # the kh*kw taps, then the lower median (torch.median semantics).
    vals = [_take(_take(x_ref, h_axis, i, h_out), w_axis, j, w_out)
            for i in range(kh) for j in range(kw)]
    k = len(vals)
    for rnd in range(k):
        for a in range(rnd % 2, k - 1, 2):
            vals[a], vals[a + 1] = _sort2(vals[a], vals[a + 1])
    o_ref[...] = vals[(k - 1) // 2]


# ------------------------------ tiling helpers -------------------------------

def _vmem_budget():
    """(vmem_limit_bytes for CompilerParams, per-step working-set target)."""
    try:
        cap = int(pltpu.get_tpu_info().vmem_capacity_bytes)
    except Exception:  # noqa: BLE001 - be robust off-TPU / older jax
        cap = 64 << 20  # v7x per-TC VMEM is the smallest across generations
    vmem_limit = min(cap // 2, 64 << 20)
    return vmem_limit, vmem_limit // 3


def _wlast_bytes(tb, hc, wp, kh, kw, n_tmp, isz):
    """(8,128)-padded VMEM footprint of one grid step, W-on-lanes layout."""
    ho, w1 = hc - kh + 1, wp - kw + 1
    return tb * isz * (2 * _r8(hc) * _r128(wp)          # double-buffered input
                       + 2 * _r8(ho) * _r128(w1)        # double-buffered output
                       + n_tmp * _r8(ho) * _r128(wp))   # live temporaries


def _blast_bytes(tbl, hc, wp, kh, kw, n_tmp, isz):
    """(8,128)-padded VMEM footprint of one grid step, batch-on-lanes layout."""
    ho, w1 = hc - kh + 1, wp - kw + 1
    return tbl * isz * (2 * hc * _r8(wp)
                        + 2 * ho * _r8(w1)
                        + n_tmp * ho * _r8(wp))


def _median_map(xb, kh, kw):
    """Stride-1 median map of padded images xb: (B, Hp, Wp) -> (B, h1, w1)."""
    B, Hp, Wp = xb.shape
    h1, w1 = Hp - kh + 1, Wp - kw + 1
    isz = jnp.dtype(xb.dtype).itemsize
    n_tmp = 6 if (kh == 3 and kw == 3) else kh * kw + 2
    vmem_limit, budget = _vmem_budget()

    # ---- layout choice: put the densest axis on the 128-wide lane dim ------
    eff_w = Wp / _r128(Wp)
    eff_b = B / _r128(B)
    batch_last = eff_b > eff_w

    def chunk_bytes(hc):
        if batch_last:
            return _blast_bytes(128, hc, Wp, kh, kw, n_tmp, isz)
        return _wlast_bytes(1, hc, Wp, kh, kw, n_tmp, isz)

    # ---- H-chunking (kh-1 row halo) so blocks fit VMEM and the grid has ----
    # ---- >= 2 steps even for a single large image (v7x megacore).       ----
    out_rows = h1
    force_split = (B == 1 and h1 >= 64)
    if chunk_bytes(Hp) > budget or force_split:
        oc = _r8(h1)
        while oc > 8 and chunk_bytes(oc + kh - 1) > budget:
            oc = _r8(max(8, oc // 2))
        if force_split:
            oc = min(oc, max(8, _r8(pl.cdiv(h1, 2))))
        out_rows = max(1, min(oc, h1))

    if out_rows < h1:
        n_chunks = pl.cdiv(h1, out_rows)
        hc_in = out_rows + kh - 1
        rows_needed = n_chunks * out_rows + kh - 1
        if rows_needed > Hp:
            xb = jnp.pad(xb, ((0, 0), (0, rows_needed - Hp), (0, 0)),
                         mode="edge")  # extra rows only feed discarded outputs
        row_idx = (jnp.arange(n_chunks)[:, None] * out_rows
                   + jnp.arange(hc_in)[None, :])
        xb = xb[:, row_idx, :].reshape(B * n_chunks, hc_in, Wp)
    else:
        n_chunks = 1

    Bv, Hc, _ = xb.shape
    Hoc = Hc - kh + 1

    cparams = pltpu.CompilerParams(
        dimension_semantics=("parallel",),
        vmem_limit_bytes=int(vmem_limit))

    if batch_last:
        # Lane-dense layout: batch on the 128-wide lane axis -> unmasked
        # stores, horizontal taps are sublane (not lane) shifts.
        kern = functools.partial(_median_kernel, kh=kh, kw=kw,
                                 h_out=Hoc, w_out=w1, h_axis=0, w_axis=1)
        xt = jnp.transpose(xb, (1, 2, 0))            # (Hc, Wp, Bv)
        tbl = 128
        while (tbl * 2 <= _r128(Bv)
               and _blast_bytes(tbl * 2, Hc, Wp, kh, kw, n_tmp, isz) <= budget
               and pl.cdiv(_r128(Bv), tbl * 2) >= 2):
            tbl *= 2
        b_pad = pl.cdiv(Bv, tbl) * tbl
        if b_pad != Bv:
            xt = jnp.pad(xt, ((0, 0), (0, 0), (0, b_pad - Bv)))
        out = pl.pallas_call(
            kern,
            out_shape=jax.ShapeDtypeStruct((Hoc, w1, b_pad), xb.dtype),
            grid_spec=pltpu.PrefetchScalarGridSpec(
                num_scalar_prefetch=0,
                grid=(b_pad // tbl,),
                in_specs=[pl.BlockSpec((Hc, Wp, tbl), lambda b: (0, 0, b))],
                out_specs=pl.BlockSpec((Hoc, w1, tbl), lambda b: (0, 0, b))),
            compiler_params=cparams,
        )(xt)
        out = jnp.transpose(out, (2, 0, 1))[:Bv]     # (Bv, Hoc, w1)
    else:
        # W on lanes; tile over (virtual) images, keep >= 2 grid steps.
        kern = functools.partial(_median_kernel, kh=kh, kw=kw,
                                 h_out=Hoc, w_out=w1, h_axis=1, w_axis=2)
        tb = 1
        tb_cap = max(1, pl.cdiv(Bv, 2)) if Bv >= 2 else 1
        while (tb * 2 <= tb_cap
               and _wlast_bytes(tb * 2, Hc, Wp, kh, kw, n_tmp, isz) <= budget):
            tb *= 2
        b_pad = pl.cdiv(Bv, tb) * tb
        if b_pad != Bv:
            xb = jnp.pad(xb, ((0, b_pad - Bv), (0, 0), (0, 0)))
        out = pl.pallas_call(
            kern,
            out_shape=jax.ShapeDtypeStruct((b_pad, Hoc, w1), xb.dtype),
            grid_spec=pltpu.PrefetchScalarGridSpec(
                num_scalar_prefetch=0,
                grid=(b_pad // tb,),
                in_specs=[pl.BlockSpec((tb, Hc, Wp), lambda b: (b, 0, 0))],
                out_specs=pl.BlockSpec((tb, Hoc, w1), lambda b: (b, 0, 0))),
            compiler_params=cparams,
        )(xb)
        out = out[:Bv]

    if n_chunks > 1:
        out = out.reshape(B, n_chunks * Hoc, w1)[:, :h1, :]
    return out


# --------------------------------- wrapper -----------------------------------

@functools.partial(jax.jit,
                   static_argnames=("kernel_size", "stride", "padding", "same"))
def median_pool2d(x, kernel_size=3, stride=1, padding=0, same=False):
    """Forward of MedianPool2d. x: (N, C, H, W)."""
    kh, kw = _pair(kernel_size)
    sh, sw = _pair(stride)
    N, C, H, W = x.shape

    if same:
        ph = max(kh - sh, 0) if H % sh == 0 else max(kh - H % sh, 0)
        pw = max(kw - sw, 0) if W % sw == 0 else max(kw - W % sw, 0)
        pad_l, pad_t = pw // 2, ph // 2
        pad_r, pad_b = pw - pad_l, ph - pad_t
    else:
        pad_l, pad_r, pad_t, pad_b = _quadruple(padding)

    xp = x
    if pad_l or pad_r or pad_t or pad_b:
        # TODO(synk): fold reflect padding into the kernel (halo + in-kernel
        # edge handling) to remove this extra HBM pass.
        xp = jnp.pad(x, ((0, 0), (0, 0), (pad_t, pad_b), (pad_l, pad_r)),
                     mode="reflect")
    Hp, Wp = H + pad_t + pad_b, W + pad_l + pad_r

    h1, w1 = Hp - kh + 1, Wp - kw + 1
    out = _median_map(xp.reshape(N * C, Hp, Wp), kh, kw)   # stride-1 map

    if sh != 1 or sw != 1:
        # TODO(synk): take strided taps inside the kernel instead of computing
        # the full stride-1 median map and subsampling it.
        ho = (Hp - kh) // sh + 1
        wo = (Wp - kw) // sw + 1
        out = out[:, ::sh, ::sw][:, :ho, :wo]
        return out.reshape(N, C, ho, wo)
    return out.reshape(N, C, h1, w1)


# ---------------------------- pure-JAX reference -----------------------------

def _reference(x, kernel_size=3, stride=1, padding=0, same=False):
    kh, kw = _pair(kernel_size)
    sh, sw = _pair(stride)
    N, C, H, W = x.shape
    if same:
        ph = max(kh - sh, 0) if H % sh == 0 else max(kh - H % sh, 0)
        pw = max(kw - sw, 0) if W % sw == 0 else max(kw - W % sw, 0)
        pad_l, pad_t = pw // 2, ph // 2
        pad_r, pad_b = pw - pad_l, ph - pad_t
    else:
        pad_l, pad_r, pad_t, pad_b = _quadruple(padding)
    xp = x
    if pad_l or pad_r or pad_t or pad_b:
        xp = jnp.pad(x, ((0, 0), (0, 0), (pad_t, pad_b), (pad_l, pad_r)),
                     mode="reflect")
    Hp, Wp = H + pad_t + pad_b, W + pad_l + pad_r
    ho = (Hp - kh) // sh + 1
    wo = (Wp - kw) // sw + 1
    taps = [xp[:, :, i:i + sh * (ho - 1) + 1:sh, j:j + sw * (wo - 1) + 1:sw]
            for i in range(kh) for j in range(kw)]
    win = jnp.stack(taps, axis=-1)
    return jnp.sort(win, axis=-1)[..., (kh * kw - 1) // 2]


if __name__ == "__main__":
    key = jax.random.PRNGKey(0)
    x = jax.random.normal(key, (2, 4, 16, 16), dtype=jnp.float32)

    # Default config: kernel_size=3, stride=1, padding=0, same=False
    out = jax.block_until_ready(median_pool2d(x))
    ref = _reference(x)
    assert out.shape == (2, 4, 14, 14), out.shape
    assert jnp.allclose(out, ref), float(jnp.max(jnp.abs(out - ref)))

    # "same" reflect-padding path (output keeps 16x16)
    out_same = jax.block_until_ready(median_pool2d(x, same=True))
    ref_same = _reference(x, same=True)
    assert out_same.shape == (2, 4, 16, 16), out_same.shape
    assert jnp.allclose(out_same, ref_same), \
        float(jnp.max(jnp.abs(out_same - ref_same)))

    # strided pooling path
    out_s2 = jax.block_until_ready(median_pool2d(x, stride=2, same=True))
    ref_s2 = _reference(x, stride=2, same=True)
    assert out_s2.shape == ref_s2.shape, (out_s2.shape, ref_s2.shape)
    assert jnp.allclose(out_s2, ref_s2), \
        float(jnp.max(jnp.abs(out_s2 - ref_s2)))

    print("KERNEL_OK")
</pallas_src>

<mosaic_0001>
module attributes {stable_mosaic.version = 11 : i64} {
  func.func @_median_kernel(%arg0: i32, %arg1: memref<4x16x16xf32, #tpu.memory_space<vmem>>, %arg2: memref<4x14x14xf32, #tpu.memory_space<vmem>>) attributes {dimension_semantics = [#tpu.dimension_semantics<parallel>], iteration_bounds = array<i64: 2>, scalar_prefetch = 0 : i64, scratch_operands = 0 : i64, tpu.core_type = #tpu.core_type<tc>, window_params = [{transform_indices = @transform_0, window_bounds = array<i64: 4, 16, 16>}, {transform_indices = @transform_1, window_bounds = array<i64: 4, 14, 14>}]} {
    %c0 = arith.constant 0 : index
    %c0_0 = arith.constant 0 : index
    %c0_1 = arith.constant 0 : index
    %0 = vector.load %arg1[%c0, %c0_0, %c0_1] : memref<4x16x16xf32, #tpu.memory_space<vmem>>, vector<4x14x16xf32>
    %c0_2 = arith.constant 0 : index
    %c1 = arith.constant 1 : index
    %c0_3 = arith.constant 0 : index
    %1 = vector.load %arg1[%c0_2, %c1, %c0_3] : memref<4x16x16xf32, #tpu.memory_space<vmem>>, vector<4x14x16xf32>
    %c0_4 = arith.constant 0 : index
    %c2 = arith.constant 2 : index
    %c0_5 = arith.constant 0 : index
    %2 = vector.load %arg1[%c0_4, %c2, %c0_5] : memref<4x16x16xf32, #tpu.memory_space<vmem>>, vector<4x14x16xf32>
    %3 = arith.minimumf %0, %1 : vector<4x14x16xf32>
    %4 = arith.maximumf %0, %1 : vector<4x14x16xf32>
    %5 = arith.minimumf %4, %2 : vector<4x14x16xf32>
    %6 = arith.maximumf %4, %2 : vector<4x14x16xf32>
    %7 = arith.minimumf %3, %5 : vector<4x14x16xf32>
    %8 = arith.maximumf %3, %5 : vector<4x14x16xf32>
    %9 = vector.extract_strided_slice %7 {offsets = [0, 0, 0], sizes = [4, 14, 14], strides = [1, 1, 1]} : vector<4x14x16xf32> to vector<4x14x14xf32>
    %10 = vector.extract_strided_slice %7 {offsets = [0, 0, 1], sizes = [4, 14, 14], strides = [1, 1, 1]} : vector<4x14x16xf32> to vector<4x14x14xf32>
    %11 = vector.extract_strided_slice %7 {offsets = [0, 0, 2], sizes = [4, 14, 14], strides = [1, 1, 1]} : vector<4x14x16xf32> to vector<4x14x14xf32>
    %12 = arith.maximumf %9, %10 : vector<4x14x14xf32>
    %13 = arith.maximumf %12, %11 : vector<4x14x14xf32>
    %14 = vector.extract_strided_slice %8 {offsets = [0, 0, 0], sizes = [4, 14, 14], strides = [1, 1, 1]} : vector<4x14x16xf32> to vector<4x14x14xf32>
    %15 = vector.extract_strided_slice %8 {offsets = [0, 0, 1], sizes = [4, 14, 14], strides = [1, 1, 1]} : vector<4x14x16xf32> to vector<4x14x14xf32>
    %16 = vector.extract_strided_slice %8 {offsets = [0, 0, 2], sizes = [4, 14, 14], strides = [1, 1, 1]} : vector<4x14x16xf32> to vector<4x14x14xf32>
    %17 = arith.minimumf %14, %15 : vector<4x14x14xf32>
    %18 = arith.maximumf %14, %15 : vector<4x14x14xf32>
    %19 = arith.minimumf %18, %16 : vector<4x14x14xf32>
    %20 = arith.maximumf %17, %19 : vector<4x14x14xf32>
    %21 = vector.extract_strided_slice %6 {offsets = [0, 0, 0], sizes = [4, 14, 14], strides = [1, 1, 1]} : vector<4x14x16xf32> to vector<4x14x14xf32>
    %22 = vector.extract_strided_slice %6 {offsets = [0, 0, 1], sizes = [4, 14, 14], strides = [1, 1, 1]} : vector<4x14x16xf32> to vector<4x14x14xf32>
    %23 = vector.extract_strided_slice %6 {offsets = [0, 0, 2], sizes = [4, 14, 14], strides = [1, 1, 1]} : vector<4x14x16xf32> to vector<4x14x14xf32>
    %24 = arith.minimumf %21, %22 : vector<4x14x14xf32>
    %25 = arith.minimumf %24, %23 : vector<4x14x14xf32>
    %26 = arith.minimumf %13, %20 : vector<4x14x14xf32>
    %27 = arith.maximumf %13, %20 : vector<4x14x14xf32>
    %28 = arith.minimumf %27, %25 : vector<4x14x14xf32>
    %29 = arith.maximumf %26, %28 : vector<4x14x14xf32>
    %c0_6 = arith.constant 0 : index
    %c0_7 = arith.constant 0 : index
    %c0_8 = arith.constant 0 : index
    %30 = vector.load %arg2[%c0_6, %c0_7, %c0_8] : memref<4x14x14xf32, #tpu.memory_space<vmem>>, vector<4x14x14xf32>
    tpu.vector_store %arg2[%c0_6, %c0_7, %c0_8], %29 {strides = array<i32>} : memref<4x14x14xf32, #tpu.memory_space<vmem>>, vector<4x14x14xf32>,
    return
  }
  func.func @transform_0(%arg0: i32) -> (i32, i32, i32) {
    %c0_i32 = arith.constant 0 : i32
    %c0_i32_0 = arith.constant 0 : i32
    %c0_i32_1 = arith.constant 0 : i32
    return %arg0, %c0_i32, %c0_i32_0 : i32, i32, i32
  }
  func.func @transform_1(%arg0: i32) -> (i32, i32, i32) {
    %c0_i32 = arith.constant 0 : i32
    %c0_i32_0 = arith.constant 0 : i32
    %c0_i32_1 = arith.constant 0 : i32
    return %arg0, %c0_i32, %c0_i32_0 : i32, i32, i32
  }
}

</mosaic_0001>

<llo_original>
// kernel: median_pool2d.1
$region0: #{median_pool2d.1}
  #allocation0 [shape = 'u32[]', space=smem, size = 0x4, offset = 0x4, fixed_abs, tag = 'smem constant byte address 0x4 - core index']
  #allocation1 [shape = 'u32[144,128]{1,0:T(1,128)}', space=vmem, size = 0x12000, scoped, tag = 'internal scratch']
  %s0 = inlined_call_operand.hbm [shape: f32[8,16,16], index: 0, kind: input, shape index: {}]
  %s1 = inlined_call_operand.vmem [shape: f32[8,14,14], index: 1, kind: output, shape index: {}]
  %s2 = sld [smem:[#allocation0]]
  $region41: #{median_pool2d.1} parent=0
    _
  %s4 = ssub.s32 1, %s2
  %s5 = scalar_select 0, %s4, %s2
  $region1: #{median_pool2d.1} parent=0
    #allocation2 [shape = 'u8[65536]{0}', space=vmem, size = 0x10000, scoped, tag = 'input window, operand 0']
    #allocation3 [shape = 's32[2]{0}', space=sflag, size = 0x8, scoped, tag = 'scoped memory for median_pool2d.1']
    %6 = vsyncpa [#allocation3], 0
    %s7 = scalar_lea.sflag [#allocation3], 1
    %8 = vsyncpa %s7, 0
    loop: start=0, step=1, limit=4
    $region2: #{median_pool2d.1} parent=1 // loop_pre_header
      _
    $region3: #{median_pool2d.1} parent=1 // loop_header
      %s10 = sphi 0, %s14
      %p11 = scmp.ge.s32.totalorder %s10, 4
      %s20 = sphi 0, %s22
      %s23 = sphi 0, %s20
      %s24 = sphi 0, %s23
      %s40 = sphi 0, %s24
      %s46 = sphi 0, %s48
      %s49 = sphi 0, %s46
      %s50 = sphi 0, %s49
      %s66 = sphi 0, %s50
    $region4: #{median_pool2d.1} parent=1 // loop_header_branch
      %13 = sbr.rel (%p11) target = $region8
    $region5: #{median_pool2d.1} parent=1 // loop_body
      %s15 = ssub.s32 %s10, 1
      %s16 = ssub.s32 %s10, 2
      %s17 = sadd.s32 %s10, 1
      %s18 = ssub.s32 %s10, %s17
      %p19 = scmp.eq.s32.totalorder %s18, 0
      %s21 = sadd.s32 %s20, 1
      %s22 = scalar_select %p19, %s20, %s21
      %p25 = pneg %p19
      %p26 = scmp.eq.s32.totalorder %s10, 1
      %p27 = por %p25, %p26
      %p28 = scmp.ne.s32.totalorder %s20, %s23
      %p29 = scmp.eq.s32.totalorder %s10, 0
      %p30 = por %p28, %p29
      %p31 = scmp.ne.s32.totalorder %s20, %s23
      %p32 = scmp.eq.s32.totalorder %s15, 1
      %p33 = por %p31, %p32
      %p34 = scmp.ne.s32.totalorder %s23, %s24
      %p35 = scmp.eq.s32.totalorder %s15, 0
      %p36 = por %p34, %p35
      %p37 = scmp.ne.s32.totalorder %s23, %s24
      %p38 = scmp.eq.s32.totalorder %s16, 1
      %p39 = por %p37, %p38
      %p41 = scmp.ne.s32.totalorder %s24, %s40
      %p42 = scmp.eq.s32.totalorder %s16, 0
      %p43 = por %p41, %p42
      %s44 = ssub.s32 %s10, %s17
      %p45 = scmp.eq.s32.totalorder %s44, 0
      %s47 = sadd.s32 %s46, 1
      %s48 = scalar_select %p45, %s46, %s47
      %p51 = pneg %p45
      %p52 = scmp.eq.s32.totalorder %s10, 1
      %p53 = por %p51, %p52
      %p54 = scmp.ne.s32.totalorder %s46, %s49
      %p55 = scmp.eq.s32.totalorder %s10, 0
      %p56 = por %p54, %p55
      %p57 = scmp.ne.s32.totalorder %s46, %s49
      %p58 = scmp.eq.s32.totalorder %s15, 1
      %p59 = por %p57, %p58
      %p60 = scmp.ne.s32.totalorder %s49, %s50
      %p61 = scmp.eq.s32.totalorder %s15, 0
      %p62 = por %p60, %p61
      %p63 = scmp.ne.s32.totalorder %s49, %s50
      %p64 = scmp.eq.s32.totalorder %s16, 1
      %p65 = por %p63, %p64
      %p67 = scmp.ne.s32.totalorder %s50, %s66
      %p68 = scmp.eq.s32.totalorder %s16, 0
      %p69 = por %p67, %p68
      %p70 = scmp.le.s32.totalorder 1, %s10
      %p71 = scmp.lt.s32.totalorder %s10, 3
      %p72 = pnand %p70, %p71
      %p73 = pneg %p72
      // Predicated region
      $region9: #{median_pool2d.1} parent=5 // pred_check
        _
      $region10: #{median_pool2d.1} parent=5 // pred_check_branch
        %75 = sbr.rel (%p72) target = $region12
      $region11: #{median_pool2d.1} parent=5 // pred_region
        %s76 = ssub.s32 %s10, 1
      $region12: #{median_pool2d.1} parent=5 // pred_fallthru
        _
      %p77 = scmp.lt.s32.totalorder %s10, 2
      // Predicated region
      $region13: #{median_pool2d.1} parent=5 // pred_check
        %p78 = pneg %p77
      $region14: #{median_pool2d.1} parent=5 // pred_check_branch
        %80 = sbr.rel (%p78) target = $region16
      $region15: #{median_pool2d.1} parent=5 // pred_region
        // Predicated region
        $region17: #{median_pool2d.1} parent=15 // pred_check
          %p81 = pneg %p30
        $region18: #{median_pool2d.1} parent=15 // pred_check_branch
          %83 = sbr.rel (%p81) target = $region20
        $region19: #{median_pool2d.1} parent=15 // pred_region
          %s84 = sand.u32 %s20, 1
          %s85 = scalar_lea.sflag [#allocation3], %s84
          %s86 = sand.u32 %s20, 1
          %s87 = smul.addr %s86, 64
          %s88 = scalar_lea.vmem [#allocation2], %s87
          %s89 = smul.u32 4, %s10
          %s91 = ssub.s32 1024, 1024
          %92 = vsyncadd %s85, %s91
          %s93 = smul.addr %s89, 2
          %s94 = smul.addr %s93, 128
          %s95 = scalar_lea.hbm %s0, %s94
          %s96 = sshll.u32 %s88, 4
          %s97 = int_to_ptr.vmem [resolvable:$true] %s96
          %102 = dma.hbm_to_vmem [thread:$0]  %s95, 1024, %s97, %s85, 128, 128, 8
        $region20: #{median_pool2d.1} parent=15 // pred_fallthru
          _
      $region16: #{median_pool2d.1} parent=5 // pred_fallthru
        _
      %p103 = scmp.le.s32.totalorder 1, %s10
      %p104 = scmp.lt.s32.totalorder %s10, 3
      %p105 = pnand %p103, %p104
      %p106 = pneg %p105
      // Predicated region
      $region21: #{median_pool2d.1} parent=5 // pred_check
        _
      $region22: #{median_pool2d.1} parent=5 // pred_check_branch
        %108 = sbr.rel (%p105) target = $region24
      $region23: #{median_pool2d.1} parent=5 // pred_region
        %s109 = ssub.s32 %s10, 1
        %s110 = sand.u32 %s23, 1
        %s111 = scalar_lea.sflag [#allocation3], %s110
        %s112 = sand.u32 %s23, 1
        %s113 = smul.addr %s112, 64
        %s114 = scalar_lea.vmem [#allocation2], %s113
        // Predicated region
        $region25: #{median_pool2d.1} parent=23 // pred_check
          %p115 = pneg %p36
        $region26: #{median_pool2d.1} parent=23 // pred_check_branch
          %117 = sbr.rel (%p115) target = $region28
        $region27: #{median_pool2d.1} parent=23 // pred_region
          %118 = dma.done %s111, 1024
        $region28: #{median_pool2d.1} parent=23 // pred_fallthru
          _
        %s119 = sand.u32 %s23, 1
        %s120 = scalar_lea.sflag [#allocation3], %s119
        %s121 = sand.u32 %s23, 1
        %s122 = smul.addr %s121, 64
        %s123 = scalar_lea.vmem [#allocation2], %s122
        %p124 = pneg %p36
        %p125 = pneg %p33
        %p126 = pneg %p62
        %p127 = pneg %p59
        %s128 = smul.u32 4, %s15
        %p129 = scmp.lt.s32.totalorder %s128, 7
        %s130 = scalar_select %p129, %s128, 7
        %s131 = smul.addr %s130, 2
        %s132 = smul.addr %s131, 8
        %s133 = scalar_lea.vmem %s1, %s132
        %s134 = smul.u32 4, %s15
        %s135 = smul.u32 4, %s15
        %p136 = scmp.lt.s32.totalorder %s135, 7
        %s137 = scalar_select %p136, %s135, 7
        %s138 = smul.addr %s137, 2
        %s139 = smul.addr %s138, 8
        %s140 = scalar_lea.vmem %s1, %s139
        %s141 = smul.u32 4, %s15
        %v142 = vld [vmem:[%s114] sm:$0xff]
        %v143 = vld [vmem:[%s114 + $0x8] sm:$0x3f]
        %v144 = vld [vmem:[%s114 + $0x10] sm:$0xff]
        %v145 = vld [vmem:[%s114 + $0x18] sm:$0x3f]
        %v146 = vld [vmem:[%s114 + $0x20] sm:$0xff]
        %v147 = vld [vmem:[%s114 + $0x28] sm:$0x3f]
        %v148 = vld [vmem:[%s114 + $0x30] sm:$0xff]
        %v149 = vld [vmem:[%s114 + $0x38] sm:$0x3f]
        %v150 = vld [vmem:[%s114 + $0x1] sm:$0xff]
        %v151 = vld [vmem:[%s114 + $0x9] sm:$0x3f]
        %v152 = vld [vmem:[%s114 + $0x11] sm:$0xff]
        %v153 = vld [vmem:[%s114 + $0x19] sm:$0x3f]
        %v154 = vld [vmem:[%s114 + $0x21] sm:$0xff]
        %v155 = vld [vmem:[%s114 + $0x29] sm:$0x3f]
        %v156 = vld [vmem:[%s114 + $0x31] sm:$0xff]
        %v157 = vld [vmem:[%s114 + $0x39] sm:$0x3f]
        %v158 = vld [vmem:[%s114 + $0x2] sm:$0xff]
        %v159 = vld [vmem:[%s114 + $0xa] sm:$0x3f]
        %v160 = vld [vmem:[%s114 + $0x12] sm:$0xff]
        %v161 = vld [vmem:[%s114 + $0x1a] sm:$0x3f]
        %v162 = vld [vmem:[%s114 + $0x22] sm:$0xff]
        %v163 = vld [vmem:[%s114 + $0x2a] sm:$0x3f]
        %v164 = vld [vmem:[%s114 + $0x32] sm:$0xff]
        %v165 = vld [vmem:[%s114 + $0x3a] sm:$0x3f]
        %v166 = vmin.f32 %v142, %v150
        %v167 = vmin.f32 %v143, %v151
        %v168 = vmin.f32 %v144, %v152
        %v169 = vmin.f32 %v145, %v153
        %v170 = vmin.f32 %v146, %v154
        %v171 = vmin.f32 %v147, %v155
        %v172 = vmin.f32 %v148, %v156
        %v173 = vmin.f32 %v149, %v157
        %v174 = vmax.f32 %v142, %v150
        %v175 = vmax.f32 %v143, %v151
        %v176 = vmax.f32 %v144, %v152
        %v177 = vmax.f32 %v145, %v153
        %v178 = vmax.f32 %v146, %v154
        %v179 = vmax.f32 %v147, %v155
        %v180 = vmax.f32 %v148, %v156
        %v181 = vmax.f32 %v149, %v157
        %v182 = vmin.f32 %v174, %v158
        %v183 = vmin.f32 %v175, %v159
        %v184 = vmin.f32 %v176, %v160
        %v185 = vmin.f32 %v177, %v161
        %v186 = vmin.f32 %v178, %v162
        %v187 = vmin.f32 %v179, %v163
        %v188 = vmin.f32 %v180, %v164
        %v189 = vmin.f32 %v181, %v165
        %v190 = vmax.f32 %v174, %v158
        %v191 = vmax.f32 %v175, %v159
        %v192 = vmax.f32 %v176, %v160
        %v193 = vmax.f32 %v177, %v161
        %v194 = vmax.f32 %v178, %v162
        %v195 = vmax.f32 %v179, %v163
        %v196 = vmax.f32 %v180, %v164
        %v197 = vmax.f32 %v181, %v165
        %v198 = vmin.f32 %v166, %v182
        %v199 = vmin.f32 %v167, %v183
        %v200 = vmin.f32 %v168, %v184
        %v201 = vmin.f32 %v169, %v185
        %v202 = vmin.f32 %v170, %v186
        %v203 = vmin.f32 %v171, %v187
        %v204 = vmin.f32 %v172, %v188
        %v205 = vmin.f32 %v173, %v189
        %v206 = vmax.f32 %v166, %v182
        %v207 = vmax.f32 %v167, %v183
        %v208 = vmax.f32 %v168, %v184
        %v209 = vmax.f32 %v169, %v185
        %v210 = vmax.f32 %v170, %v186
        %v211 = vmax.f32 %v171, %v187
        %v212 = vmax.f32 %v172, %v188
        %v213 = vmax.f32 %v173, %v189
        %222 = vrot.lane.b32.xlu0 %v198, 127
        %v223 = vpop.permute.xlu0 %222
        %224 = vrot.lane.b32.xlu0 %v199, 127
        %v225 = vpop.permute.xlu0 %224
        %226 = vrot.lane.b32.xlu0 %v200, 127
        %v227 = vpop.permute.xlu0 %226
        %228 = vrot.lane.b32.xlu0 %v201, 127
        %v229 = vpop.permute.xlu0 %228
        %230 = vrot.lane.b32.xlu0 %v202, 127
        %v231 = vpop.permute.xlu0 %230
        %232 = vrot.lane.b32.xlu0 %v203, 127
        %v233 = vpop.permute.xlu0 %232
        %234 = vrot.lane.b32.xlu0 %v204, 127
        %v235 = vpop.permute.xlu0 %234
        %236 = vrot.lane.b32.xlu0 %v205, 127
        %v237 = vpop.permute.xlu0 %236
        %v246 = vmax.f32 %v198, %v223
        %v247 = vmax.f32 %v199, %v225
        %v248 = vmax.f32 %v200, %v227
        %v249 = vmax.f32 %v201, %v229
        %v250 = vmax.f32 %v202, %v231
        %v251 = vmax.f32 %v203, %v233
        %v252 = vmax.f32 %v204, %v235
        %v253 = vmax.f32 %v205, %v237
        %254 = vrot.lane.b32.xlu0 %v198, 126
        %v255 = vpop.permute.xlu0 %254
        %256 = vrot.lane.b32.xlu0 %v199, 126
        %v257 = vpop.permute.xlu0 %256
        %258 = vrot.lane.b32.xlu0 %v200, 126
        %v259 = vpop.permute.xlu0 %258
        %260 = vrot.lane.b32.xlu0 %v201, 126
        %v261 = vpop.permute.xlu0 %260
        %262 = vrot.lane.b32.xlu0 %v202, 126
        %v263 = vpop.permute.xlu0 %262
        %264 = vrot.lane.b32.xlu0 %v203, 126
        %v265 = vpop.permute.xlu0 %264
        %266 = vrot.lane.b32.xlu0 %v204, 126
        %v267 = vpop.permute.xlu0 %266
        %268 = vrot.lane.b32.xlu0 %v205, 126
        %v269 = vpop.permute.xlu0 %268
        %v278 = vmax.f32 %v246, %v255
        %v279 = vmax.f32 %v247, %v257
        %v280 = vmax.f32 %v248, %v259
        %v281 = vmax.f32 %v249, %v261
        %v282 = vmax.f32 %v250, %v263
        %v283 = vmax.f32 %v251, %v265
        %v284 = vmax.f32 %v252, %v267
        %v285 = vmax.f32 %v253, %v269
        %294 = vrot.lane.b32.xlu0 %v206, 127
        %v295 = vpop.permute.xlu0 %294
        %296 = vrot.lane.b32.xlu0 %v207, 127
        %v297 = vpop.permute.xlu0 %296
        %298 = vrot.lane.b32.xlu0 %v208, 127
        %v299 = vpop.permute.xlu0 %298
        %300 = vrot.lane.b32.xlu0 %v209, 127
        %v301 = vpop.permute.xlu0 %300
        %302 = vrot.lane.b32.xlu0 %v210, 127
        %v303 = vpop.permute.xlu0 %302
        %304 = vrot.lane.b32.xlu0 %v211, 127
        %v305 = vpop.permute.xlu0 %304
        %306 = vrot.lane.b32.xlu0 %v212, 127
        %v307 = vpop.permute.xlu0 %306
        %308 = vrot.lane.b32.xlu0 %v213, 127
        %v309 = vpop.permute.xlu0 %308
        %v318 = vmin.f32 %v206, %v295
        %v319 = vmin.f32 %v207, %v297
        %v320 = vmin.f32 %v208, %v299
        %v321 = vmin.f32 %v209, %v301
        %v322 = vmin.f32 %v210, %v303
        %v323 = vmin.f32 %v211, %v305
        %v324 = vmin.f32 %v212, %v307
        %v325 = vmin.f32 %v213, %v309
        %v326 = vmax.f32 %v206, %v295
        %v327 = vmax.f32 %v207, %v297
        %v328 = vmax.f32 %v208, %v299
        %v329 = vmax.f32 %v209, %v301
        %v330 = vmax.f32 %v210, %v303
        %v331 = vmax.f32 %v211, %v305
        %v332 = vmax.f32 %v212, %v307
        %v333 = vmax.f32 %v213, %v309
        %334 = vrot.lane.b32.xlu0 %v206, 126
        %v335 = vpop.permute.xlu0 %334
        %336 = vrot.lane.b32.xlu0 %v207, 126
        %v337 = vpop.permute.xlu0 %336
        %338 = vrot.lane.b32.xlu0 %v208, 126
        %v339 = vpop.permute.xlu0 %338
        %340 = vrot.lane.b32.xlu0 %v209, 126
        %v341 = vpop.permute.xlu0 %340
        %342 = vrot.lane.b32.xlu0 %v210, 126
        %v343 = vpop.permute.xlu0 %342
        %344 = vrot.lane.b32.xlu0 %v211, 126
        %v345 = vpop.permute.xlu0 %344
        %346 = vrot.lane.b32.xlu0 %v212, 126
        %v347 = vpop.permute.xlu0 %346
        %348 = vrot.lane.b32.xlu0 %v213, 126
        %v349 = vpop.permute.xlu0 %348
        %v358 = vmin.f32 %v326, %v335
        %v359 = vmin.f32 %v327, %v337
        %v360 = vmin.f32 %v328, %v339
        %v361 = vmin.f32 %v329, %v341
        %v362 = vmin.f32 %v330, %v343
        %v363 = vmin.f32 %v331, %v345
        %v364 = vmin.f32 %v332, %v347
        %v365 = vmin.f32 %v333, %v349
        %v366 = vmax.f32 %v318, %v358
        %v367 = vmax.f32 %v319, %v359
        %v368 = vmax.f32 %v320, %v360
        %v369 = vmax.f32 %v321, %v361
        %v370 = vmax.f32 %v322, %v362
        %v371 = vmax.f32 %v323, %v363
        %v372 = vmax.f32 %v324, %v364
        %v373 = vmax.f32 %v325, %v365
        %382 = vrot.lane.b32.xlu0 %v190, 127
        %v383 = vpop.permute.xlu0 %382
        %384 = vrot.lane.b32.xlu0 %v191, 127
        %v385 = vpop.permute.xlu0 %384
        %386 = vrot.lane.b32.xlu0 %v192, 127
        %v387 = vpop.permute.xlu0 %386
        %388 = vrot.lane.b32.xlu0 %v193, 127
        %v389 = vpop.permute.xlu0 %388
        %390 = vrot.lane.b32.xlu0 %v194, 127
        %v391 = vpop.permute.xlu0 %390
        %392 = vrot.lane.b32.xlu0 %v195, 127
        %v393 = vpop.permute.xlu0 %392
        %394 = vrot.lane.b32.xlu0 %v196, 127
        %v395 = vpop.permute.xlu0 %394
        %396 = vrot.lane.b32.xlu0 %v197, 127
        %v397 = vpop.permute.xlu0 %396
        %v406 = vmin.f32 %v190, %v383
        %v407 = vmin.f32 %v191, %v385
        %v408 = vmin.f32 %v192, %v387
        %v409 = vmin.f32 %v193, %v389
        %v410 = vmin.f32 %v194, %v391
        %v411 = vmin.f32 %v195, %v393
        %v412 = vmin.f32 %v196, %v395
        %v413 = vmin.f32 %v197, %v397
        %414 = vrot.lane.b32.xlu0 %v190, 126
        %v415 = vpop.permute.xlu0 %414
        %416 = vrot.lane.b32.xlu0 %v191, 126
        %v417 = vpop.permute.xlu0 %416
        %418 = vrot.lane.b32.xlu0 %v192, 126
        %v419 = vpop.permute.xlu0 %418
        %420 = vrot.lane.b32.xlu0 %v193, 126
        %v421 = vpop.permute.xlu0 %420
        %422 = vrot.lane.b32.xlu0 %v194, 126
        %v423 = vpop.permute.xlu0 %422
        %424 = vrot.lane.b32.xlu0 %v195, 126
        %v425 = vpop.permute.xlu0 %424
        %426 = vrot.lane.b32.xlu0 %v196, 126
        %v427 = vpop.permute.xlu0 %426
        %428 = vrot.lane.b32.xlu0 %v197, 126
        %v429 = vpop.permute.xlu0 %428
        %v438 = vmin.f32 %v406, %v415
        %v439 = vmin.f32 %v407, %v417
        %v440 = vmin.f32 %v408, %v419
        %v441 = vmin.f32 %v409, %v421
        %v442 = vmin.f32 %v410, %v423
        %v443 = vmin.f32 %v411, %v425
        %v444 = vmin.f32 %v412, %v427
        %v445 = vmin.f32 %v413, %v429
        %v446 = vmin.f32 %v278, %v366
        %v447 = vmin.f32 %v279, %v367
        %v448 = vmin.f32 %v280, %v368
        %v449 = vmin.f32 %v281, %v369
        %v450 = vmin.f32 %v282, %v370
        %v451 = vmin.f32 %v283, %v371
        %v452 = vmin.f32 %v284, %v372
        %v453 = vmin.f32 %v285, %v373
        %v454 = vmax.f32 %v278, %v366
        %v455 = vmax.f32 %v279, %v367
        %v456 = vmax.f32 %v280, %v368
        %v457 = vmax.f32 %v281, %v369
        %v458 = vmax.f32 %v282, %v370
        %v459 = vmax.f32 %v283, %v371
        %v460 = vmax.f32 %v284, %v372
        %v461 = vmax.f32 %v285, %v373
        %v462 = vmin.f32 %v454, %v438
        %v463 = vmin.f32 %v455, %v439
        %v464 = vmin.f32 %v456, %v440
        %v465 = vmin.f32 %v457, %v441
        %v466 = vmin.f32 %v458, %v442
        %v467 = vmin.f32 %v459, %v443
        %v468 = vmin.f32 %v460, %v444
        %v469 = vmin.f32 %v461, %v445
        %v470 = vmax.f32 %v446, %v462
        %v471 = vmax.f32 %v447, %v463
        %v472 = vmax.f32 %v448, %v464
        %v473 = vmax.f32 %v449, %v465
        %v474 = vmax.f32 %v450, %v466
        %v475 = vmax.f32 %v451, %v467
        %v476 = vmax.f32 %v452, %v468
        %v477 = vmax.f32 %v453, %v469
        %vm478 = vcmask 113664
        %479 = vst.msk [vmem:[%s140] sm:$0xff] %vm478, %v470
        %vm480 = vcmask 111616
        %481 = vst.msk [vmem:[%s140 + $0x8] sm:$0x3f] %vm480, %v471
        %482 = vst.msk [vmem:[%s140 + $0x10] sm:$0xff] %vm478, %v472
        %483 = vst.msk [vmem:[%s140 + $0x18] sm:$0x3f] %vm480, %v473
        %484 = vst.msk [vmem:[%s140 + $0x20] sm:$0xff] %vm478, %v474
        %485 = vst.msk [vmem:[%s140 + $0x28] sm:$0x3f] %vm480, %v475
        %486 = vst.msk [vmem:[%s140 + $0x30] sm:$0xff] %vm478, %v476
        %487 = vst.msk [vmem:[%s140 + $0x38] sm:$0x3f] %vm480, %v477
        %s488 = smul.u32 4, %s15
        %p489 = scmp.lt.s32.totalorder %s488, 7
        %s490 = scalar_select %p489, %s488, 7
        %s491 = smul.addr %s490, 2
        %s492 = smul.addr %s491, 8
        %s493 = scalar_lea.vmem %s1, %s492
        // Predicated region
        $region29: #{median_pool2d.1} parent=23 // pred_check
          %p494 = pneg %p59
        $region30: #{median_pool2d.1} parent=23 // pred_check_branch
          %496 = sbr.rel (%p494) target = $region32
        $region31: #{median_pool2d.1} parent=23 // pred_region
          %s497 = smul.u32 4, %s15
        $region32: #{median_pool2d.1} parent=23 // pred_fallthru
          _
      $region24: #{median_pool2d.1} parent=5 // pred_fallthru
        _
      %p498 = scmp.le.s32.totalorder 2, %s10
      // Predicated region
      $region33: #{median_pool2d.1} parent=5 // pred_check
        %p499 = pneg %p498
      $region34: #{median_pool2d.1} parent=5 // pred_check_branch
        %501 = sbr.rel (%p499) target = $region36
      $region35: #{median_pool2d.1} parent=5 // pred_region
        %s502 = ssub.s32 %s10, 2
        // Predicated region
        $region37: #{median_pool2d.1} parent=35 // pred_check
          %p503 = pneg %p65
        $region38: #{median_pool2d.1} parent=35 // pred_check_branch
          %505 = sbr.rel (%p503) target = $region40
        $region39: #{median_pool2d.1} parent=35 // pred_region
          %s506 = smul.u32 4, %s16
          %p507 = scmp.lt.s32.totalorder %s506, 7
          %s508 = scalar_select %p507, %s506, 7
          %s509 = smul.addr %s508, 2
          %s510 = smul.addr %s509, 8
          %s511 = scalar_lea.vmem %s1, %s510
        $region40: #{median_pool2d.1} parent=35 // pred_fallthru
          _
      $region36: #{median_pool2d.1} parent=5 // pred_fallthru
        _
    $region6: #{median_pool2d.1} parent=1 // loop_footer
      %s14 = sadd.s32 1, %s10
    $region7: #{median_pool2d.1} parent=1 // loop_footer_branch
      %9 = sbr.rel target = $region3
    $region8: #{median_pool2d.1} parent=1 // loop_exit
      _
    %512 = vsyncpa [#allocation3], 1
    %s513 = scalar_lea.sflag [#allocation3], 1
    %514 = vsyncpa %s513, 1

</llo_original>
